<compile_context>
chip_gen: v7x
topology: tpu7x:2x2x1
jax: 0.10.0
libtpu: 0.0.40
codegen_flags: <defaults>
</compile_context>

<pallas_src>
import functools

import jax
import jax.numpy as jnp
from jax import lax
from jax.experimental import pallas as pl
from jax.experimental.pallas import tpu as pltpu


def _patch_copy_kernel(xt_ref, o_ref, *, num_patch, patch_len, stride, s_begin):
    # xt_ref: (B_BLK, n_vars, seq_len)               -- time on the lane axis
    # o_ref : (B_BLK, num_patch, n_vars, patch_len)  -- torch.unfold layout
    if num_patch <= 128:
        # Static unroll: slice starts are compile-time constants, so each patch
        # is a cheap static lane-offset load + full store (LLO schedules/overlaps
        # them freely under the DMA, which is the real bottleneck).
        for p in range(num_patch):
            start = s_begin + p * stride
            o_ref[:, p, :, :] = xt_ref[:, :, start:start + patch_len]
    else:
        # Rare very-long-sequence configs: bound code size with an scf.for.
        def body(p, carry):
            start = s_begin + p * stride
            val = xt_ref[:, :, pl.ds(start, patch_len)]
            o_ref[:, pl.ds(p, 1), :, :] = val[:, None, :, :]
            return carry

        lax.fori_loop(0, num_patch, body, 0)


def _round_up(n, m):
    return ((n + m - 1) // m) * m


def _pick_batch_block(bs, bytes_per_row, budget_bytes):
    """Largest divisor of bs whose double-buffered working set fits the budget,
    capped so the (parallel) batch grid has >= 2 steps when bs > 1 (so a v7x
    megacore can shard the copy across both TensorCores)."""
    max_rows = max(1, budget_bytes // max(1, 2 * bytes_per_row))
    cap = max(1, (bs + 1) // 2) if bs > 1 else 1
    b = max(1, min(bs, max_rows, cap))
    while bs % b:
        b -= 1
    return b


def patch_pallas(x, patch_len, stride):
    """PatchTST `Patch.forward` (torch.unfold over time) on TPU.

    x: [bs, seq_len, n_vars] -> [bs, num_patch, n_vars, patch_len]
    """
    bs, seq_len, n_vars = x.shape
    if seq_len < patch_len:
        # PyTorch's negative s_begin slicing semantics are not reproduced here;
        # a VMEM ref has no bounds check, so guard explicitly.
        raise ValueError(f"seq_len ({seq_len}) must be >= patch_len ({patch_len})")

    num_patch = (max(seq_len, patch_len) - patch_len) // stride + 1
    tgt_len = patch_len + stride * (num_patch - 1)
    s_begin = seq_len - tgt_len

    # Fast path: non-overlapping patches are a pure slice + reshape; XLA does
    # this at HBM roofline, no kernel needed.
    if stride == patch_len:
        y = x[:, s_begin:s_begin + tgt_len, :]
        y = y.reshape(bs, num_patch, patch_len, n_vars)
        return jnp.transpose(y, (0, 1, 3, 2))

    itemsize = jnp.dtype(x.dtype).itemsize
    sub_mult = 8 * max(1, 4 // itemsize)  # sublane tile: 8 (f32) / 16 (bf16) / 32 (i8)
    v_pad = _round_up(n_vars, sub_mult)
    in_row = v_pad * _round_up(seq_len, 128) * itemsize
    out_row = num_patch * v_pad * _round_up(patch_len, 128) * itemsize
    b_blk = _pick_batch_block(bs, in_row + out_row, budget_bytes=20 << 20)
    grid = (bs // b_blk,)

    # Move time onto the lane (minor) axis ONCE, on the smaller input, so the
    # kernel writes the torch.unfold layout directly (no post-kernel permute of
    # the overlap-factor-larger output array).
    xt = jnp.transpose(x, (0, 2, 1))  # (bs, n_vars, seq_len)

    kernel = functools.partial(
        _patch_copy_kernel,
        num_patch=num_patch, patch_len=patch_len, stride=stride, s_begin=s_begin,
    )

    return pl.pallas_call(
        kernel,
        out_shape=jax.ShapeDtypeStruct((bs, num_patch, n_vars, patch_len), x.dtype),
        grid=grid,
        in_specs=[pl.BlockSpec((b_blk, n_vars, seq_len), lambda b: (b, 0, 0))],
        out_specs=pl.BlockSpec((b_blk, num_patch, n_vars, patch_len),
                               lambda b: (b, 0, 0, 0)),
        compiler_params=pltpu.CompilerParams(
            dimension_semantics=("parallel",),
            vmem_limit_bytes=48 << 20,
        ),
    )(xt)


def patch_reference(x, patch_len, stride):
    """Pure-JAX reference reproducing torch.unfold semantics."""
    bs, seq_len, n_vars = x.shape
    num_patch = (max(seq_len, patch_len) - patch_len) // stride + 1
    tgt_len = patch_len + stride * (num_patch - 1)
    s_begin = seq_len - tgt_len
    x = x[:, s_begin:, :]
    patches = [
        jnp.transpose(x[:, p * stride:p * stride + patch_len, :], (0, 2, 1))
        for p in range(num_patch)
    ]
    return jnp.stack(patches, axis=1)  # (bs, num_patch, n_vars, patch_len)


if __name__ == "__main__":
    key = jax.random.PRNGKey(0)

    patch_jit = jax.jit(patch_pallas, static_argnums=(1, 2))

    # Overlapping-patch config exercising the Pallas kernel path:
    # seq_len=16, patch_len=6, stride=4 -> num_patch=3, tgt_len=14, s_begin=2.
    bs, seq_len, n_vars = 2, 16, 4
    patch_len, stride = 6, 4
    x = jax.random.normal(key, (bs, seq_len, n_vars), dtype=jnp.float32)

    out = jax.block_until_ready(patch_jit(x, patch_len, stride))
    ref = patch_reference(x, patch_len, stride)
    assert out.shape == ref.shape, (out.shape, ref.shape)
    assert jnp.allclose(out, ref), "Pallas output mismatch vs reference (kernel path)"

    # Non-overlapping config (stride == patch_len) exercises the reshape fast path.
    x2 = jax.random.normal(jax.random.PRNGKey(1), (3, 17, 5), dtype=jnp.float32)
    out2 = jax.block_until_ready(patch_jit(x2, 4, 4))
    ref2 = patch_reference(x2, 4, 4)
    assert out2.shape == ref2.shape, (out2.shape, ref2.shape)
    assert jnp.allclose(out2, ref2), "Output mismatch vs reference (fast path)"

    print("KERNEL_OK")
</pallas_src>

<mosaic_0001>
module attributes {stable_mosaic.version = 11 : i64} {
  func.func @_patch_copy_kernel(%arg0: i32, %arg1: memref<1x4x16xf32, #tpu.memory_space<vmem>>, %arg2: memref<1x3x4x6xf32, #tpu.memory_space<vmem>>) attributes {dimension_semantics = [#tpu.dimension_semantics<parallel>], iteration_bounds = array<i64: 2>, scalar_prefetch = 0 : i64, scratch_operands = 0 : i64, tpu.core_type = #tpu.core_type<tc>, window_params = [{transform_indices = @transform_0, window_bounds = array<i64: 1, 4, 16>}, {transform_indices = @transform_1, window_bounds = array<i64: 1, 3, 4, 6>}]} {
    %c0 = arith.constant 0 : index
    %c0_0 = arith.constant 0 : index
    %c2 = arith.constant 2 : index
    %0 = vector.load %arg1[%c0, %c0_0, %c2] : memref<1x4x16xf32, #tpu.memory_space<vmem>>, vector<1x4x6xf32>
    %c0_1 = arith.constant 0 : index
    %c0_2 = arith.constant 0 : index
    %c0_3 = arith.constant 0 : index
    %c0_4 = arith.constant 0 : index
    %1 = vector.load %arg2[%c0_1, %c0_2, %c0_3, %c0_4] : memref<1x3x4x6xf32, #tpu.memory_space<vmem>>, vector<1x1x4x6xf32>
    %2 = vector.shape_cast %1 : vector<1x1x4x6xf32> to vector<1x4x6xf32>
    %3 = vector.shape_cast %0 : vector<1x4x6xf32> to vector<1x1x4x6xf32>
    tpu.vector_store %arg2[%c0_1, %c0_2, %c0_3, %c0_4], %3 {strides = array<i32>} : memref<1x3x4x6xf32, #tpu.memory_space<vmem>>, vector<1x1x4x6xf32>,
    %c0_5 = arith.constant 0 : index
    %c0_6 = arith.constant 0 : index
    %c6 = arith.constant 6 : index
    %4 = vector.load %arg1[%c0_5, %c0_6, %c6] : memref<1x4x16xf32, #tpu.memory_space<vmem>>, vector<1x4x6xf32>
    %c0_7 = arith.constant 0 : index
    %c1 = arith.constant 1 : index
    %c0_8 = arith.constant 0 : index
    %c0_9 = arith.constant 0 : index
    %5 = vector.load %arg2[%c0_7, %c1, %c0_8, %c0_9] : memref<1x3x4x6xf32, #tpu.memory_space<vmem>>, vector<1x1x4x6xf32>
    %6 = vector.shape_cast %5 : vector<1x1x4x6xf32> to vector<1x4x6xf32>
    %7 = vector.shape_cast %4 : vector<1x4x6xf32> to vector<1x1x4x6xf32>
    tpu.vector_store %arg2[%c0_7, %c1, %c0_8, %c0_9], %7 {strides = array<i32>} : memref<1x3x4x6xf32, #tpu.memory_space<vmem>>, vector<1x1x4x6xf32>,
    %c0_10 = arith.constant 0 : index
    %c0_11 = arith.constant 0 : index
    %c10 = arith.constant 10 : index
    %8 = vector.load %arg1[%c0_10, %c0_11, %c10] : memref<1x4x16xf32, #tpu.memory_space<vmem>>, vector<1x4x6xf32>
    %c0_12 = arith.constant 0 : index
    %c2_13 = arith.constant 2 : index
    %c0_14 = arith.constant 0 : index
    %c0_15 = arith.constant 0 : index
    %9 = vector.load %arg2[%c0_12, %c2_13, %c0_14, %c0_15] : memref<1x3x4x6xf32, #tpu.memory_space<vmem>>, vector<1x1x4x6xf32>
    %10 = vector.shape_cast %9 : vector<1x1x4x6xf32> to vector<1x4x6xf32>
    %11 = vector.shape_cast %8 : vector<1x4x6xf32> to vector<1x1x4x6xf32>
    tpu.vector_store %arg2[%c0_12, %c2_13, %c0_14, %c0_15], %11 {strides = array<i32>} : memref<1x3x4x6xf32, #tpu.memory_space<vmem>>, vector<1x1x4x6xf32>,
    return
  }
  func.func @transform_0(%arg0: i32) -> (i32, i32, i32) {
    %c0_i32 = arith.constant 0 : i32
    %c0_i32_0 = arith.constant 0 : i32
    %c0_i32_1 = arith.constant 0 : i32
    return %arg0, %c0_i32, %c0_i32_0 : i32, i32, i32
  }
  func.func @transform_1(%arg0: i32) -> (i32, i32, i32, i32) {
    %c0_i32 = arith.constant 0 : i32
    %c0_i32_0 = arith.constant 0 : i32
    %c0_i32_1 = arith.constant 0 : i32
    %c0_i32_2 = arith.constant 0 : i32
    return %arg0, %c0_i32, %c0_i32_0, %c0_i32_1 : i32, i32, i32, i32
  }
}

</mosaic_0001>

<llo_original>
// kernel: patch_pallas.1
$region0: #{patch_pallas.1}
  #allocation0 [shape = 'u32[]', space=smem, size = 0x4, offset = 0x4, fixed_abs, tag = 'smem constant byte address 0x4 - core index']
  #allocation1 [shape = 'u32[144,128]{1,0:T(1,128)}', space=vmem, size = 0x12000, scoped, tag = 'internal scratch']
  %s0 = inlined_call_operand.hbm [shape: f32[2,4,16], index: 0, kind: input, shape index: {}]
  %s1 = inlined_call_operand.hbm [shape: f32[2,3,4,6], index: 1, kind: output, shape index: {}]
  %s2 = sld [smem:[#allocation0]]
  $region41: #{patch_pallas.1} parent=0
    _
  %s4 = ssub.s32 1, %s2
  %s5 = scalar_select 0, %s4, %s2
  $region1: #{patch_pallas.1} parent=0
    #allocation2 [shape = 'u8[4096]{0}', space=vmem, size = 0x1000, scoped, tag = 'input window, operand 0']
    #allocation3 [shape = 's32[2]{0}', space=sflag, size = 0x8, scoped, tag = 'scoped memory for patch_pallas.1']
    #allocation4 [shape = 's32[2]{0}', space=sflag, size = 0x8, scoped, tag = 'scoped memory for patch_pallas.1']
    #allocation5 [shape = 'u8[12288]{0}', space=vmem, size = 0x3000, scoped, tag = 'output window, operand 0']
    %6 = vsyncpa [#allocation3], 0
    %s7 = scalar_lea.sflag [#allocation3], 1
    %8 = vsyncpa %s7, 0
    %9 = vsyncpa [#allocation4], 0
    %s10 = scalar_lea.sflag [#allocation4], 1
    %11 = vsyncpa %s10, 0
    loop: start=0, step=1, limit=4
    $region2: #{patch_pallas.1} parent=1 // loop_pre_header
      _
    $region3: #{patch_pallas.1} parent=1 // loop_header
      %s13 = sphi 0, %s17
      %p14 = scmp.ge.s32.totalorder %s13, 4
      %s23 = sphi 0, %s25
      %s26 = sphi 0, %s23
      %s27 = sphi 0, %s26
      %s43 = sphi 0, %s27
      %s49 = sphi 0, %s51
      %s52 = sphi 0, %s49
      %s53 = sphi 0, %s52
      %s69 = sphi 0, %s53
    $region4: #{patch_pallas.1} parent=1 // loop_header_branch
      %16 = sbr.rel (%p14) target = $region8
    $region5: #{patch_pallas.1} parent=1 // loop_body
      %s18 = ssub.s32 %s13, 1
      %s19 = ssub.s32 %s13, 2
      %s20 = sadd.s32 %s13, 1
      %s21 = ssub.s32 %s13, %s20
      %p22 = scmp.eq.s32.totalorder %s21, 0
      %s24 = sadd.s32 %s23, 1
      %s25 = scalar_select %p22, %s23, %s24
      %p28 = pneg %p22
      %p29 = scmp.eq.s32.totalorder %s13, 1
      %p30 = por %p28, %p29
      %p31 = scmp.ne.s32.totalorder %s23, %s26
      %p32 = scmp.eq.s32.totalorder %s13, 0
      %p33 = por %p31, %p32
      %p34 = scmp.ne.s32.totalorder %s23, %s26
      %p35 = scmp.eq.s32.totalorder %s18, 1
      %p36 = por %p34, %p35
      %p37 = scmp.ne.s32.totalorder %s26, %s27
      %p38 = scmp.eq.s32.totalorder %s18, 0
      %p39 = por %p37, %p38
      %p40 = scmp.ne.s32.totalorder %s26, %s27
      %p41 = scmp.eq.s32.totalorder %s19, 1
      %p42 = por %p40, %p41
      %p44 = scmp.ne.s32.totalorder %s27, %s43
      %p45 = scmp.eq.s32.totalorder %s19, 0
      %p46 = por %p44, %p45
      %s47 = ssub.s32 %s13, %s20
      %p48 = scmp.eq.s32.totalorder %s47, 0
      %s50 = sadd.s32 %s49, 1
      %s51 = scalar_select %p48, %s49, %s50
      %p54 = pneg %p48
      %p55 = scmp.eq.s32.totalorder %s13, 1
      %p56 = por %p54, %p55
      %p57 = scmp.ne.s32.totalorder %s49, %s52
      %p58 = scmp.eq.s32.totalorder %s13, 0
      %p59 = por %p57, %p58
      %p60 = scmp.ne.s32.totalorder %s49, %s52
      %p61 = scmp.eq.s32.totalorder %s18, 1
      %p62 = por %p60, %p61
      %p63 = scmp.ne.s32.totalorder %s52, %s53
      %p64 = scmp.eq.s32.totalorder %s18, 0
      %p65 = por %p63, %p64
      %p66 = scmp.ne.s32.totalorder %s52, %s53
      %p67 = scmp.eq.s32.totalorder %s19, 1
      %p68 = por %p66, %p67
      %p70 = scmp.ne.s32.totalorder %s53, %s69
      %p71 = scmp.eq.s32.totalorder %s19, 0
      %p72 = por %p70, %p71
      %p73 = scmp.le.s32.totalorder 1, %s13
      %p74 = scmp.lt.s32.totalorder %s13, 3
      %p75 = pnand %p73, %p74
      %p76 = pneg %p75
      // Predicated region
      $region9: #{patch_pallas.1} parent=5 // pred_check
        _
      $region10: #{patch_pallas.1} parent=5 // pred_check_branch
        %78 = sbr.rel (%p75) target = $region12
      $region11: #{patch_pallas.1} parent=5 // pred_region
        %s79 = ssub.s32 %s13, 1
      $region12: #{patch_pallas.1} parent=5 // pred_fallthru
        _
      %p80 = scmp.lt.s32.totalorder %s13, 2
      // Predicated region
      $region13: #{patch_pallas.1} parent=5 // pred_check
        %p81 = pneg %p80
      $region14: #{patch_pallas.1} parent=5 // pred_check_branch
        %83 = sbr.rel (%p81) target = $region16
      $region15: #{patch_pallas.1} parent=5 // pred_region
        // Predicated region
        $region17: #{patch_pallas.1} parent=15 // pred_check
          %p84 = pneg %p33
        $region18: #{patch_pallas.1} parent=15 // pred_check_branch
          %86 = sbr.rel (%p84) target = $region20
        $region19: #{patch_pallas.1} parent=15 // pred_region
          %s87 = sand.u32 %s23, 1
          %s88 = scalar_lea.sflag [#allocation3], %s87
          %s89 = sand.u32 %s23, 1
          %s90 = smul.addr %s89, 4
          %s91 = scalar_lea.vmem [#allocation2], %s90
          %s93 = ssub.s32 64, 64
          %94 = vsyncadd %s88, %s93
          %s95 = smul.addr %s13, 64
          %s96 = scalar_lea.hbm %s0, %s95
          %s98 = sshll.u32 %s91, 4
          %s99 = int_to_ptr.vmem [resolvable:$true] %s98
          %101 = dma.hbm_to_vmem [thread:$0]  %s96, 64, %s99, %s88
        $region20: #{patch_pallas.1} parent=15 // pred_fallthru
          _
      $region16: #{patch_pallas.1} parent=5 // pred_fallthru
        _
      %p102 = scmp.le.s32.totalorder 1, %s13
      %p103 = scmp.lt.s32.totalorder %s13, 3
      %p104 = pnand %p102, %p103
      %p105 = pneg %p104
      // Predicated region
      $region21: #{patch_pallas.1} parent=5 // pred_check
        _
      $region22: #{patch_pallas.1} parent=5 // pred_check_branch
        %107 = sbr.rel (%p104) target = $region24
      $region23: #{patch_pallas.1} parent=5 // pred_region
        %s108 = ssub.s32 %s13, 1
        %s109 = sand.u32 %s26, 1
        %s110 = scalar_lea.sflag [#allocation3], %s109
        %s111 = sand.u32 %s26, 1
        %s112 = smul.addr %s111, 4
        %s113 = scalar_lea.vmem [#allocation2], %s112
        // Predicated region
        $region25: #{patch_pallas.1} parent=23 // pred_check
          %p114 = pneg %p39
        $region26: #{patch_pallas.1} parent=23 // pred_check_branch
          %116 = sbr.rel (%p114) target = $region28
        $region27: #{patch_pallas.1} parent=23 // pred_region
          %117 = dma.done %s110, 64
        $region28: #{patch_pallas.1} parent=23 // pred_fallthru
          _
        %s118 = sand.u32 %s26, 1
        %s119 = scalar_lea.sflag [#allocation3], %s118
        %s120 = sand.u32 %s26, 1
        %s121 = smul.addr %s120, 4
        %s122 = scalar_lea.vmem [#allocation2], %s121
        %p123 = pneg %p39
        %p124 = pneg %p36
        %p125 = pneg %p65
        %p126 = pneg %p62
        %s127 = sand.u32 %s52, 1
        %s128 = scalar_lea.sflag [#allocation4], %s127
        %s129 = sand.u32 %s52, 1
        %s130 = smul.addr %s129, 12
        %s131 = scalar_lea.vmem [#allocation5], %s130
        %v132 = vld [vmem:[%s113] sm:$0xf]
        %134 = vrot.lane.b32.xlu0 %v132, 126
        %v135 = vpop.permute.xlu0 %134
        %vm137 = vcmask 44032
        %138 = vst.msk [vmem:[%s131] sm:$0xf] %vm137, %v135
        %v139 = vld [vmem:[%s113] sm:$0xf]
        %141 = vrot.lane.b32.xlu0 %v139, 122
        %v142 = vpop.permute.xlu0 %141
        %s144 = scalar_lea.vmem %s131, 4 [#allocation5]
        %145 = vst.msk [vmem:[%s144] sm:$0xf] %vm137, %v142
        %v146 = vld [vmem:[%s113] sm:$0xf]
        %148 = vrot.lane.b32.xlu0 %v146, 118
        %v149 = vpop.permute.xlu0 %148
        %s151 = scalar_lea.vmem %s131, 8 [#allocation5]
        %152 = vst.msk [vmem:[%s151] sm:$0xf] %vm137, %v149
        %s153 = sand.u32 %s52, 1
        %s154 = scalar_lea.sflag [#allocation4], %s153
        %s155 = sand.u32 %s52, 1
        %s156 = smul.addr %s155, 12
        %s157 = scalar_lea.vmem [#allocation5], %s156
        // Predicated region
        $region29: #{patch_pallas.1} parent=23 // pred_check
          %p158 = pneg %p62
        $region30: #{patch_pallas.1} parent=23 // pred_check_branch
          %160 = sbr.rel (%p158) target = $region32
        $region31: #{patch_pallas.1} parent=23 // pred_region
          %s162 = ssub.s32 192, 192
          %163 = vsyncadd %s154, %s162
          %s164 = smul.addr %s18, 3
          %s165 = smul.addr %s164, 64
          %s166 = scalar_lea.hbm %s1, %s165
          %s167 = sshll.u32 %s157, 4
          %s168 = int_to_ptr.vmem [resolvable:$true] %s167
          %173 = dma.vmem_to_hbm [thread:$0]  %s168, 192, %s166, %s154, 64, 64, 4
        $region32: #{patch_pallas.1} parent=23 // pred_fallthru
          _
      $region24: #{patch_pallas.1} parent=5 // pred_fallthru
        _
      %p174 = scmp.le.s32.totalorder 2, %s13
      // Predicated region
      $region33: #{patch_pallas.1} parent=5 // pred_check
        %p175 = pneg %p174
      $region34: #{patch_pallas.1} parent=5 // pred_check_branch
        %177 = sbr.rel (%p175) target = $region36
      $region35: #{patch_pallas.1} parent=5 // pred_region
        %s178 = ssub.s32 %s13, 2
        // Predicated region
        $region37: #{patch_pallas.1} parent=35 // pred_check
          %p179 = pneg %p68
        $region38: #{patch_pallas.1} parent=35 // pred_check_branch
          %181 = sbr.rel (%p179) target = $region40
        $region39: #{patch_pallas.1} parent=35 // pred_region
          %s182 = sand.u32 %s53, 1
          %s183 = scalar_lea.sflag [#allocation4], %s182
          %s184 = sand.u32 %s53, 1
          %s185 = smul.addr %s184, 12
          %s186 = scalar_lea.vmem [#allocation5], %s185
          %187 = dma.done %s183, 192
        $region40: #{patch_pallas.1} parent=35 // pred_fallthru
          _
      $region36: #{patch_pallas.1} parent=5 // pred_fallthru
        _
    $region6: #{patch_pallas.1} parent=1 // loop_footer
      %s17 = sadd.s32 1, %s13
    $region7: #{patch_pallas.1} parent=1 // loop_footer_branch
      %12 = sbr.rel target = $region3
    $region8: #{patch_pallas.1} parent=1 // loop_exit
      _
    %188 = vsyncpa [#allocation3], 1
    %s189 = scalar_lea.sflag [#allocation3], 1
    %190 = vsyncpa %s189, 1
    %191 = vsyncpa [#allocation4], 1
    %s192 = scalar_lea.sflag [#allocation4], 1
    %193 = vsyncpa %s192, 1

</llo_original>
